<compile_context>
chip_gen: v7x
topology: tpu7x:2x2x1
jax: 0.10.0
libtpu: 0.0.40
codegen_flags: <defaults>
</compile_context>

<pallas_src>
import functools

import numpy as np
import jax
import jax.numpy as jnp
from jax.experimental import pallas as pl
from jax.experimental.pallas import tpu as pltpu


def make_gaussian_kernel_2d(kernel_size: int, cutoff: float) -> np.ndarray:
    """2D Gaussian kernel, identical to LowPassFilter.create_gaussian_kernel."""
    center = kernel_size // 2
    k = np.zeros((kernel_size, kernel_size), dtype=np.float32)
    for i in range(kernel_size):
        for j in range(kernel_size):
            distance = (i - center) ** 2 + (j - center) ** 2
            k[i, j] = np.exp(-distance / (2.0 * cutoff ** 2))
    return (k / k.sum()).astype(np.float32)


def _gaussian_1d(kernel_size: int, cutoff: float):
    """1-D separable factor: the 2-D Gaussian is exactly outer(g1, g1)."""
    pad = kernel_size // 2
    e = np.exp(-((np.arange(kernel_size) - pad) ** 2) / (2.0 * float(cutoff) ** 2))
    g1 = e / e.sum()
    return tuple(float(v) for v in g1)


def _round_up(x: int, m: int) -> int:
    return ((x + m - 1) // m) * m


def _vmem_budget_bytes() -> int:
    cap = 64 * 1024 * 1024            # conservative fallback = v7x per-TC VMEM
    try:
        cap = int(pltpu.get_tpu_info().vmem_capacity_bytes)
    except Exception:
        pass
    # ~70% of physical: headroom for compiler scratch, semaphores, etc.
    return int(0.70 * cap)


def _estimate_vmem(B: int, S: int, C: int, itemsize: int, min_b: int) -> int:
    Bp = _round_up(B, min_b)          # sublane padding of the (B, S) tiles
    Sp = _round_up(S, 128)            # lane padding
    io = 2 * (C + 1) * Bp * Sp * itemsize      # double-buffered input+output blocks
    tmp = 6 * Bp * Sp * 4                      # xs/t/y/roll temps (f32) + flat/col (i32)
    return io + tmp + (2 << 20)                # fixed headroom


def _choose_batch_block(N: int, S: int, C: int, itemsize: int, budget: int):
    """Pick the per-grid-step batch block B (images on the sublane axis)."""
    # Sublane-fill minimum: 8 rows for 32-bit dtypes, 16 for 16-bit dtypes.
    min_b = 16 if itemsize < 4 else 8
    Sp = _round_up(S, 128)
    bytes_per_img = (2 * (C + 1) * itemsize + 6 * 4) * Sp
    b_budget = max(1, int((budget - (2 << 20)) // max(1, bytes_per_img)))

    if N <= min_b:
        # Tiny batch: take the whole batch dim (a legal "full dim" block even if
        # it is not a multiple of 8/16); sublane padding waste is negligible.
        B = N
    else:
        B = min(N, b_budget)
        if B < N:
            # Layout rule: the sublane block dim must be a multiple of 8/16
            # unless it equals the full array dim.
            B = max(min_b, (B // min_b) * min_b)
        # Keep >= 2 parallel grid steps (v7x has 2 TensorCores) whenever that
        # does not drop B below the sublane-fill minimum.
        if B >= N and N >= 2 * min_b:
            B = min(N, _round_up((N + 1) // 2, min_b))
    return B, min_b


def _lowpass_kernel(x_ref, o_ref, *, g1, W, S):
    # x_ref: (C, B, S) native dtype block; o_ref: (B, S) native dtype block.
    K = len(g1)
    pad = K // 2
    C = x_ref.shape[0]

    # Channel reduction: plain VPU adds over the C leading tiles, f32 accumulate.
    xs = x_ref[0].astype(jnp.float32)
    for c in range(1, C):
        xs = xs + x_ref[c].astype(jnp.float32)                      # (B, S)

    # Hoisted index maps (built once per grid step, reused by every tap).
    flat = jax.lax.broadcasted_iota(jnp.int32, xs.shape, 1)         # (B, S)
    if W & (W - 1) == 0:
        col = jax.lax.bitwise_and(flat, jnp.int32(W - 1))
    else:
        col = jax.lax.rem(flat, jnp.int32(W))

    def shifted(v, offset):
        # Returns v[f + offset]; elements that wrap around the flattened plane
        # or cross a row border are zeroed by the caller's boundary mask.
        if offset == 0:
            return v
        return pltpu.roll(v, shift=(-offset) % S, axis=1)

    # Horizontal pass (taps along W).
    t = jnp.float32(g1[pad]) * xs
    for i in range(K):
        d = i - pad
        if d == 0:
            continue
        v = shifted(xs, d)
        valid = (col >= -d) if d < 0 else (col < W - d)
        t = t + jnp.float32(g1[i]) * jnp.where(valid, v, jnp.float32(0.0))

    # Vertical pass (taps along H == strides of W in the flat layout).
    y = jnp.float32(g1[pad]) * t
    for i in range(K):
        d = i - pad
        if d == 0:
            continue
        v = shifted(t, d * W)
        valid = (flat >= (-d) * W) if d < 0 else (flat < S - d * W)
        y = y + jnp.float32(g1[i]) * jnp.where(valid, v, jnp.float32(0.0))

    o_ref[...] = y.astype(o_ref.dtype)


def lowpass_filter(x, cutoff: float = 1.0, kernel_size: int = 3):
    """Pallas TPU implementation of LowPassFilter.forward."""
    if x.ndim == 3:
        x = x[None]                      # PyTorch path: unsqueeze(0), return 4D
    N, C, H, W = x.shape
    assert C == 3, "LowPassFilter weight is built for 3 input channels"
    assert kernel_size % 2 == 1, "LowPassFilter expects an odd kernel_size"

    S = H * W
    g1 = _gaussian_1d(kernel_size, cutoff)

    # (C, N, S): channels are the tile's leading (un-padded) dim, images the
    # sublane dim, flattened H*W the lane dim.
    x_cns = jnp.transpose(x, (1, 0, 2, 3)).reshape(C, N, S)

    itemsize = jnp.dtype(x.dtype).itemsize
    budget = _vmem_budget_bytes()
    B, min_b = _choose_batch_block(N, S, C, itemsize, budget)
    est = _estimate_vmem(B, S, C, itemsize, min_b)
    vmem_limit = int(min(budget, max(est, 32 << 20)))

    kernel = functools.partial(_lowpass_kernel, g1=g1, W=W, S=S)

    out = pl.pallas_call(
        kernel,
        out_shape=jax.ShapeDtypeStruct((N, S), x.dtype),
        grid_spec=pltpu.PrefetchScalarGridSpec(
            num_scalar_prefetch=0,
            grid=(pl.cdiv(N, B),),
            in_specs=[
                # (C, B, S) block: last two dims are (B, S) -> no channel padding.
                pl.BlockSpec((C, B, S), lambda n: (0, n, 0)),
            ],
            out_specs=pl.BlockSpec((B, S), lambda n: (n, 0)),
        ),
        compiler_params=pltpu.CompilerParams(
            dimension_semantics=("parallel",),
            vmem_limit_bytes=vmem_limit,
        ),
    )(x_cns)

    return out.reshape(N, 1, H, W)


def _reference(x, cutoff=1.0, kernel_size=3):
    """Plain-JAX reference matching F.conv2d(x, w, padding=k//2)."""
    if x.ndim == 3:
        x = x[None]
    g2 = make_gaussian_kernel_2d(kernel_size, cutoff)
    w = jnp.asarray(np.stack([g2, g2, g2])[None])        # (O=1, I=3, k, k)
    return jax.lax.conv_general_dilated(
        x.astype(jnp.float32), w,
        window_strides=(1, 1),
        padding=[(kernel_size // 2, kernel_size // 2)] * 2,
        dimension_numbers=("NCHW", "OIHW", "NCHW"),
        precision=jax.lax.Precision.HIGHEST,
    )


if __name__ == "__main__":
    key = jax.random.PRNGKey(0)
    # Shapes consistent with the module: batch=2, 3 channels, 16x16 spatial.
    x = jax.random.normal(key, (2, 3, 16, 16), dtype=jnp.float32)

    out = jax.block_until_ready(lowpass_filter(x, cutoff=1.0, kernel_size=3))
    ref = _reference(x, cutoff=1.0, kernel_size=3)
    assert out.shape == (2, 1, 16, 16)
    assert out.dtype == x.dtype
    np.testing.assert_allclose(np.asarray(out), np.asarray(ref), rtol=1e-5, atol=1e-5)

    # 3-D input branch (returns 4-D, like the PyTorch module).
    x3 = jax.random.normal(jax.random.PRNGKey(1), (3, 16, 16), dtype=jnp.float32)
    out3 = jax.block_until_ready(lowpass_filter(x3))
    ref3 = _reference(x3)
    assert out3.shape == (1, 1, 16, 16)
    np.testing.assert_allclose(np.asarray(out3), np.asarray(ref3), rtol=1e-5, atol=1e-5)

    # Batch large enough to exercise sublane batching (B >= 8) and a 2-step grid.
    xb = jax.random.normal(jax.random.PRNGKey(2), (16, 3, 16, 16), dtype=jnp.float32)
    outb = jax.block_until_ready(lowpass_filter(xb, cutoff=1.0, kernel_size=3))
    refb = _reference(xb, cutoff=1.0, kernel_size=3)
    assert outb.shape == (16, 1, 16, 16)
    np.testing.assert_allclose(np.asarray(outb), np.asarray(refb), rtol=1e-5, atol=1e-5)

    # Native-dtype path: bf16 in -> bf16 out (no host upcast, f32 accumulation).
    xh = xb.astype(jnp.bfloat16)
    outh = jax.block_until_ready(lowpass_filter(xh, cutoff=1.0, kernel_size=3))
    assert outh.dtype == jnp.bfloat16
    np.testing.assert_allclose(np.asarray(outh.astype(jnp.float32)),
                               np.asarray(_reference(xh.astype(jnp.float32))),
                               rtol=5e-2, atol=5e-2)

    # Larger kernel_size / non-unit cutoff path.
    out5 = jax.block_until_ready(lowpass_filter(x, cutoff=2.0, kernel_size=5))
    ref5 = _reference(x, cutoff=2.0, kernel_size=5)
    np.testing.assert_allclose(np.asarray(out5), np.asarray(ref5), rtol=1e-5, atol=1e-5)

    print("KERNEL_OK")
</pallas_src>

<mosaic_0001>
module attributes {stable_mosaic.version = 11 : i64} {
  func.func @_lowpass_kernel(%arg0: i32, %arg1: memref<3x2x256xf32, #tpu.memory_space<vmem>>, %arg2: memref<2x256xf32, #tpu.memory_space<vmem>>) attributes {dimension_semantics = [#tpu.dimension_semantics<parallel>], iteration_bounds = array<i64: 1>, scalar_prefetch = 0 : i64, scratch_operands = 0 : i64, tpu.core_type = #tpu.core_type<tc>, window_params = [{transform_indices = @transform_0, window_bounds = array<i64: 3, 2, 256>}, {transform_indices = @transform_1, window_bounds = array<i64: 2, 256>}]} {
    %c0 = arith.constant 0 : index
    %c0_0 = arith.constant 0 : index
    %c0_1 = arith.constant 0 : index
    %0 = vector.load %arg1[%c0, %c0_0, %c0_1] : memref<3x2x256xf32, #tpu.memory_space<vmem>>, vector<1x2x256xf32>
    %1 = vector.shape_cast %0 : vector<1x2x256xf32> to vector<2x256xf32>
    %c1 = arith.constant 1 : index
    %c0_2 = arith.constant 0 : index
    %c0_3 = arith.constant 0 : index
    %2 = vector.load %arg1[%c1, %c0_2, %c0_3] : memref<3x2x256xf32, #tpu.memory_space<vmem>>, vector<1x2x256xf32>
    %3 = vector.shape_cast %2 : vector<1x2x256xf32> to vector<2x256xf32>
    %4 = arith.addf %1, %3 : vector<2x256xf32>
    %c2 = arith.constant 2 : index
    %c0_4 = arith.constant 0 : index
    %c0_5 = arith.constant 0 : index
    %5 = vector.load %arg1[%c2, %c0_4, %c0_5] : memref<3x2x256xf32, #tpu.memory_space<vmem>>, vector<1x2x256xf32>
    %6 = vector.shape_cast %5 : vector<1x2x256xf32> to vector<2x256xf32>
    %7 = arith.addf %4, %6 : vector<2x256xf32>
    %8 = tpu.iota {dimensions = array<i32: 1>} : vector<2x256xi32>
    %c15_i32 = arith.constant 15 : i32
    %9 = vector.broadcast %c15_i32 : i32 to vector<2x256xi32>
    %10 = arith.andi %8, %9 : vector<2x256xi32>
    %cst = arith.constant 0.451862752 : f32
    %11 = vector.broadcast %cst : f32 to vector<2x256xf32>
    %12 = arith.mulf %11, %7 : vector<2x256xf32>
    %c1_i32 = arith.constant 1 : i32
    %13 = tpu.dynamic_rotate %7 by %c1_i32 dim 1 : vector<2x256xf32>, i32 -> vector<2x256xf32>
    %c1_i32_6 = arith.constant 1 : i32
    %14 = vector.broadcast %c1_i32_6 : i32 to vector<2x256xi32>
    %15 = arith.cmpi sge, %10, %14 : vector<2x256xi32>
    %cst_7 = arith.constant 0.000000e+00 : f32
    %16 = vector.broadcast %cst_7 : f32 to vector<2x256xf32>
    %17 = arith.select %15, %13, %16 : vector<2x256xi1>, vector<2x256xf32>
    %cst_8 = arith.constant 0.274068624 : f32
    %18 = vector.broadcast %cst_8 : f32 to vector<2x256xf32>
    %19 = arith.mulf %18, %17 : vector<2x256xf32>
    %20 = arith.addf %12, %19 : vector<2x256xf32>
    %c255_i32 = arith.constant 255 : i32
    %21 = tpu.dynamic_rotate %7 by %c255_i32 dim 1 : vector<2x256xf32>, i32 -> vector<2x256xf32>
    %c15_i32_9 = arith.constant 15 : i32
    %22 = vector.broadcast %c15_i32_9 : i32 to vector<2x256xi32>
    %23 = arith.cmpi slt, %10, %22 : vector<2x256xi32>
    %cst_10 = arith.constant 0.000000e+00 : f32
    %24 = vector.broadcast %cst_10 : f32 to vector<2x256xf32>
    %25 = arith.select %23, %21, %24 : vector<2x256xi1>, vector<2x256xf32>
    %cst_11 = arith.constant 0.274068624 : f32
    %26 = vector.broadcast %cst_11 : f32 to vector<2x256xf32>
    %27 = arith.mulf %26, %25 : vector<2x256xf32>
    %28 = arith.addf %20, %27 : vector<2x256xf32>
    %cst_12 = arith.constant 0.451862752 : f32
    %29 = vector.broadcast %cst_12 : f32 to vector<2x256xf32>
    %30 = arith.mulf %29, %28 : vector<2x256xf32>
    %c16_i32 = arith.constant 16 : i32
    %31 = tpu.dynamic_rotate %28 by %c16_i32 dim 1 : vector<2x256xf32>, i32 -> vector<2x256xf32>
    %c16_i32_13 = arith.constant 16 : i32
    %32 = vector.broadcast %c16_i32_13 : i32 to vector<2x256xi32>
    %33 = arith.cmpi sge, %8, %32 : vector<2x256xi32>
    %cst_14 = arith.constant 0.000000e+00 : f32
    %34 = vector.broadcast %cst_14 : f32 to vector<2x256xf32>
    %35 = arith.select %33, %31, %34 : vector<2x256xi1>, vector<2x256xf32>
    %cst_15 = arith.constant 0.274068624 : f32
    %36 = vector.broadcast %cst_15 : f32 to vector<2x256xf32>
    %37 = arith.mulf %36, %35 : vector<2x256xf32>
    %38 = arith.addf %30, %37 : vector<2x256xf32>
    %c240_i32 = arith.constant 240 : i32
    %39 = tpu.dynamic_rotate %28 by %c240_i32 dim 1 : vector<2x256xf32>, i32 -> vector<2x256xf32>
    %c240_i32_16 = arith.constant 240 : i32
    %40 = vector.broadcast %c240_i32_16 : i32 to vector<2x256xi32>
    %41 = arith.cmpi slt, %8, %40 : vector<2x256xi32>
    %cst_17 = arith.constant 0.000000e+00 : f32
    %42 = vector.broadcast %cst_17 : f32 to vector<2x256xf32>
    %43 = arith.select %41, %39, %42 : vector<2x256xi1>, vector<2x256xf32>
    %cst_18 = arith.constant 0.274068624 : f32
    %44 = vector.broadcast %cst_18 : f32 to vector<2x256xf32>
    %45 = arith.mulf %44, %43 : vector<2x256xf32>
    %46 = arith.addf %38, %45 : vector<2x256xf32>
    %c0_19 = arith.constant 0 : index
    %c0_20 = arith.constant 0 : index
    %47 = vector.load %arg2[%c0_19, %c0_20] : memref<2x256xf32, #tpu.memory_space<vmem>>, vector<2x256xf32>
    tpu.vector_store %arg2[%c0_19, %c0_20], %46 {strides = array<i32>} : memref<2x256xf32, #tpu.memory_space<vmem>>, vector<2x256xf32>,
    return
  }
  func.func @transform_0(%arg0: i32) -> (i32, i32, i32) {
    %c0_i32 = arith.constant 0 : i32
    %c0_i32_0 = arith.constant 0 : i32
    %c0_i32_1 = arith.constant 0 : i32
    return %c0_i32, %arg0, %c0_i32_0 : i32, i32, i32
  }
  func.func @transform_1(%arg0: i32) -> (i32, i32) {
    %c0_i32 = arith.constant 0 : i32
    %c0_i32_0 = arith.constant 0 : i32
    return %arg0, %c0_i32 : i32, i32
  }
}

</mosaic_0001>

<llo_original>
// kernel: tpu_custom_call.1
$region0: #{tpu_custom_call.1}
  #allocation0 [shape = 'u32[]', space=smem, size = 0x4, offset = 0x4, fixed_abs, tag = 'smem constant byte address 0x4 - core index']
  #allocation1 [shape = 'u32[144,128]{1,0:T(1,128)}', space=vmem, size = 0x12000, scoped, tag = 'internal scratch']
  %s0 = inlined_call_operand.hbm [shape: f32[3,2,256], index: 0, kind: input, shape index: {}]
  %s1 = inlined_call_operand.hbm [shape: f32[2,256], index: 1, kind: output, shape index: {}]
  %s2 = sld [smem:[#allocation0]]
  $region18: #{tpu_custom_call.1} parent=0
    _
  %s4 = ssub.s32 1, %s2
  %s5 = scalar_select 0, %s4, %s2
  $region1: #{tpu_custom_call.1} parent=0
    #allocation2 [shape = 'u8[6144]{0}', space=vmem, size = 0x1800, scoped, tag = 'input window, operand 0, single buffered']
    #allocation3 [shape = 's32[1]{0}', space=sflag, size = 0x4, scoped, tag = 'scoped memory for tpu_custom_call.1']
    #allocation4 [shape = 's32[1]{0}', space=sflag, size = 0x4, scoped, tag = 'scoped memory for tpu_custom_call.1']
    #allocation5 [shape = 'u8[2048]{0}', space=vmem, size = 0x800, scoped, tag = 'output window, operand 0, single buffered']
    %6 = vsyncpa [#allocation3], 0
    %7 = vsyncpa [#allocation4], 0
    // Predicated region
    $region2: #{tpu_custom_call.1} parent=1 // pred_check
      _
    $region3: #{tpu_custom_call.1} parent=1 // pred_check_branch
      %9 = sbr.rel (0) target = $region5
    $region4: #{tpu_custom_call.1} parent=1 // pred_region
      %s11 = ssub.s32 192, 192
      %12 = vsyncadd [#allocation3], %s11
      %s13 = sshll.u32 [#allocation2], 4
      %s14 = int_to_ptr.vmem [resolvable:$true] %s13
      %19 = dma.hbm_to_vmem [thread:$0]  %s0, 192, %s14, [#allocation3], 64, 64, 4
    $region5: #{tpu_custom_call.1} parent=1 // pred_fallthru
      _
    // Predicated region
    $region6: #{tpu_custom_call.1} parent=1 // pred_check
      _
    $region7: #{tpu_custom_call.1} parent=1 // pred_check_branch
      %21 = sbr.rel (0) target = $region9
    $region8: #{tpu_custom_call.1} parent=1 // pred_region
      %22 = dma.done [#allocation3], 192
    $region9: #{tpu_custom_call.1} parent=1 // pred_fallthru
      _
    %v23 = vld [vmem:[#allocation2] sm:$0xf]
    %s24 = scalar_lea.vmem [#allocation2], 4
    %v25 = vld [vmem:[%s24] sm:$0xf]
    %v26 = vadd.f32 %v23, %v25
    %s27 = scalar_lea.vmem [#allocation2], 8
    %v28 = vld [vmem:[%s27] sm:$0xf]
    %v29 = vadd.f32 %v26, %v28
    %v30 = vlaneseq
    %v31 = vand.u32 %v30, 127
    %v32 = vadd.s32 %v31, 128
    %v33 = vand.u32 %v31, 15
    %v34 = vand.u32 %v32, 15
    %v35 = vmul.f32 %v29, 0.45186275
    %v38 = vunpack.c.l.s4 1983009808
    %v39 = vunpack.c.0.s8 %v38
    %v40 = vlaneseq
    %v41 = vshrl.u32 %v40, 7
    %v42 = vsub.s32 %v39, %v41
    %v43 = vrot.slane %v29, %v42
    %v44 = vcombine.high %v43, %v43
    %47 = vrot.lane.b32.xlu0 %v43, 1
    %v48 = vpop.permute.xlu0 %47
    %49 = vrot.lane.b32.xlu0 %v44, 1
    %v50 = vpop.permute.xlu0 %49
    %vm51 = vcmp.lt.s32.totalorder %v31, 1
    %v52 = vsel %vm51, %v48, %v50
    %v53 = vsel %vm51, %v50, %v48
    %vm54 = vcmp.ge.s32.totalorder %v33, 1
    %vm55 = vcmp.ge.s32.totalorder %v34, 1
    %v56 = vsel %vm54, %v53, 0.0
    %v57 = vsel %vm55, %v52, 0.0
    %v58 = vmul.f32 %v56, 0.27406862
    %v59 = vmul.f32 %v57, 0.27406862
    %v62 = vcombine.low %v58, %v59
    %v64 = vunpack.c.l.s4 1983009808
    %v65 = vunpack.c.0.s8 %v64
    %v66 = vlaneseq
    %v67 = vshrl.u32 %v66, 7
    %v68 = vsub.s32 %v65, %v67
    %v69 = vrot.slane %v62, %v68
    %v71 = vadd.f32 %v35, %v69
    %72 = vrot.lane.b32.xlu0 %v43, 127
    %v73 = vpop.permute.xlu0 %72
    %74 = vrot.lane.b32.xlu0 %v44, 127
    %v75 = vpop.permute.xlu0 %74
    %vm76 = vcmp.lt.s32.totalorder %v31, 127
    %v77 = vsel %vm76, %v73, %v75
    %v78 = vsel %vm76, %v75, %v73
    %vm79 = vcmp.lt.s32.totalorder %v33, 15
    %vm80 = vcmp.lt.s32.totalorder %v34, 15
    %v81 = vsel %vm79, %v77, 0.0
    %v82 = vsel %vm80, %v78, 0.0
    %v83 = vmul.f32 %v81, 0.27406862
    %v84 = vmul.f32 %v82, 0.27406862
    %v87 = vcombine.low %v83, %v84
    %v89 = vunpack.c.l.s4 1983009808
    %v90 = vunpack.c.0.s8 %v89
    %v91 = vlaneseq
    %v92 = vshrl.u32 %v91, 7
    %v93 = vsub.s32 %v90, %v92
    %v94 = vrot.slane %v87, %v93
    %v96 = vadd.f32 %v71, %v94
    %v97 = vmul.f32 %v96, 0.45186275
    %v100 = vunpack.c.l.s4 1983009808
    %v101 = vunpack.c.0.s8 %v100
    %v102 = vlaneseq
    %v103 = vshrl.u32 %v102, 7
    %v104 = vsub.s32 %v101, %v103
    %v105 = vrot.slane %v96, %v104
    %v106 = vcombine.high %v105, %v105
    %109 = vrot.lane.b32.xlu0 %v105, 16
    %v110 = vpop.permute.xlu0 %109
    %111 = vrot.lane.b32.xlu0 %v106, 16
    %v112 = vpop.permute.xlu0 %111
    %vm113 = vcmp.lt.s32.totalorder %v31, 16
    %v114 = vsel %vm113, %v110, %v112
    %v115 = vsel %vm113, %v112, %v110
    %vm116 = vcmp.ge.s32.totalorder %v31, 16
    %vm117 = vcmp.ge.s32.totalorder %v32, 16
    %v118 = vsel %vm116, %v115, 0.0
    %v119 = vsel %vm117, %v114, 0.0
    %v120 = vmul.f32 %v118, 0.27406862
    %v121 = vmul.f32 %v119, 0.27406862
    %v124 = vcombine.low %v120, %v121
    %v126 = vunpack.c.l.s4 1983009808
    %v127 = vunpack.c.0.s8 %v126
    %v128 = vlaneseq
    %v129 = vshrl.u32 %v128, 7
    %v130 = vsub.s32 %v127, %v129
    %v131 = vrot.slane %v124, %v130
    %v133 = vadd.f32 %v97, %v131
    %134 = vrot.lane.b32.xlu0 %v105, 112
    %v135 = vpop.permute.xlu0 %134
    %136 = vrot.lane.b32.xlu0 %v106, 112
    %v137 = vpop.permute.xlu0 %136
    %vm138 = vcmp.lt.s32.totalorder %v31, 112
    %v139 = vsel %vm138, %v135, %v137
    %v140 = vsel %vm138, %v137, %v135
    %vm141 = vcmp.lt.s32.totalorder %v31, 240
    %vm142 = vcmp.lt.s32.totalorder %v32, 240
    %v143 = vsel %vm141, %v139, 0.0
    %v144 = vsel %vm142, %v140, 0.0
    %v145 = vmul.f32 %v143, 0.27406862
    %v146 = vmul.f32 %v144, 0.27406862
    %v149 = vcombine.low %v145, %v146
    %v151 = vunpack.c.l.s4 1983009808
    %v152 = vunpack.c.0.s8 %v151
    %v153 = vlaneseq
    %v154 = vshrl.u32 %v153, 7
    %v155 = vsub.s32 %v152, %v154
    %v156 = vrot.slane %v149, %v155
    %v158 = vadd.f32 %v133, %v156
    %159 = vst [vmem:[#allocation5] sm:$0xf] %v158
    // Predicated region
    $region10: #{tpu_custom_call.1} parent=1 // pred_check
      _
    $region11: #{tpu_custom_call.1} parent=1 // pred_check_branch
      %161 = sbr.rel (0) target = $region13
    $region12: #{tpu_custom_call.1} parent=1 // pred_region
      %s163 = ssub.s32 64, 64
      %164 = vsyncadd [#allocation4], %s163
      %s166 = sshll.u32 [#allocation5], 4
      %s167 = int_to_ptr.vmem [resolvable:$true] %s166
      %169 = dma.vmem_to_hbm [thread:$0]  %s167, 64, %s1, [#allocation4]
    $region13: #{tpu_custom_call.1} parent=1 // pred_fallthru
      _
    // Predicated region
    $region14: #{tpu_custom_call.1} parent=1 // pred_check
      _
    $region15: #{tpu_custom_call.1} parent=1 // pred_check_branch
      %171 = sbr.rel (0) target = $region17
    $region16: #{tpu_custom_call.1} parent=1 // pred_region
      %172 = dma.done [#allocation4], 64
    $region17: #{tpu_custom_call.1} parent=1 // pred_fallthru
      _
    %173 = vsyncpa [#allocation3], 1
    %174 = vsyncpa [#allocation4], 1

</llo_original>
